<compile_context>
chip_gen: v5e
topology: v5e:2x2
jax: 0.10.0
libtpu: 0.0.40
codegen_flags: <defaults>
</compile_context>

<pallas_src>
import numpy as np
import jax
import jax.numpy as jnp
from jax.experimental import pallas as pl
from jax.experimental.pallas import tpu as pltpu

# ----------------------------- configuration --------------------------------
N_BATCH  = 2     # batch per input tensor
C_IN     = 8     # input channels to layer7
L_SEQ    = 16    # sequence length
C_MID    = 16    # layer7 output channels
C_CONV8  = 16    # conv8 output channels
N_SPK    = 2
NUM_EMED = 4
F_OUT    = N_SPK * NUM_EMED


def _r8(n):
    return ((n + 7) // 8) * 8


# Packed-parameter slab layout: every section starts on an 8-row (sublane-tile)
# boundary so the in-kernel ref slices are aligned, free views.
OFF_DW   = 0                         # rows [0, 3)   : depthwise taps (3, C_IN), BN scale folded
OFF_PW   = _r8(OFF_DW + 3)           # rows [8, 16)  : pointwise (C_IN, C_MID), BN scale folded
OFF_C8   = _r8(OFF_PW + C_IN)        # rows [16, 32) : conv8 (C_MID, C_CONV8)
OFF_FC   = _r8(OFF_C8 + C_MID)       # rows [32, 48) : fc (C_CONV8, F_OUT)
OFF_B    = _r8(OFF_FC + C_CONV8)     # rows [48, 52) : biases (dw, pw, c8, fc)
OFF_POOL = _r8(OFF_B + 4)            # rows [56, 56+B): segment-mean pooling matrix (B, B*L)


# ------------------------------- kernel -------------------------------------
def _make_kernel(c_in, c_mid, c_8, f_out, n_samples, seq_len):
    m_rows = n_samples * seq_len

    def kernel(x_ref,     # (M, Cin)   activations, NLC flattened, f32
               p_ref,     # (R, Cmax)  packed params (weights/biases/pool), f32
               out_ref):  # (B, F)     fc output
        x = x_ref[...]                                            # (M, Cin) f32

        # --- packed parameter views (static, sublane-aligned slices) --------
        dw_w = p_ref[OFF_DW:OFF_DW + 3, :c_in]                    # (3, Cin) f32
        bias = p_ref[OFF_B:OFF_B + 4, :]                          # (4, Cmax) f32
        dw_b = bias[0:1, :c_in]
        pw_b = bias[1:2, :c_mid]
        c8_b = bias[2:3, :c_8]
        fc_b = bias[3:4, :f_out]
        # Matmul weights -> bf16 so each contraction is a single MXU pass.
        pw_w = p_ref[OFF_PW:OFF_PW + c_in, :c_mid].astype(jnp.bfloat16)
        c8_w = p_ref[OFF_C8:OFF_C8 + c_mid, :c_8].astype(jnp.bfloat16)
        fc_w = p_ref[OFF_FC:OFF_FC + c_8, :f_out].astype(jnp.bfloat16)
        pool = p_ref[OFF_POOL:OFF_POOL + n_samples, :m_rows].astype(jnp.bfloat16)

        # --- layer7 depthwise conv1d (k=3, stride=1, pad=1, groups=C) -------
        # Shift the flattened slab by +/-1 row (pltpu.roll needs a non-negative
        # shift, so "+1" uses shift = M-1) and zero rows that would read across
        # a sample boundary. Masks are cheap (M,1) columns; elementwise path is
        # kept f32 (v5e VPU has no bf16).
        row = jax.lax.broadcasted_iota(jnp.int32, (m_rows, 1), 0)
        if (seq_len & (seq_len - 1)) == 0:                        # power-of-two
            row_in_seq = jnp.bitwise_and(row, seq_len - 1)
        else:
            row_in_seq = jax.lax.rem(row, seq_len)
        prev_ok = (row_in_seq >= 1).astype(jnp.float32)           # (M,1)
        next_ok = (row_in_seq <= seq_len - 2).astype(jnp.float32) # (M,1)
        x_prev = pltpu.roll(x, shift=1, axis=0) * prev_ok            # x[j-1]
        x_next = pltpu.roll(x, shift=m_rows - 1, axis=0) * next_ok   # x[j+1]

        y = x_prev * dw_w[0:1, :] + x * dw_w[1:2, :] + x_next * dw_w[2:3, :]
        y = jnp.maximum(y + dw_b, 0.0)                            # folded BN bias + ReLU

        # --- layer7 pointwise 1x1 conv (+ folded BN) + ReLU ------------------
        z = jnp.dot(y.astype(jnp.bfloat16), pw_w,
                    preferred_element_type=jnp.float32)
        z = jnp.maximum(z + pw_b, 0.0)

        # --- conv8 1x1 + ReLU -------------------------------------------------
        c = jnp.dot(z.astype(jnp.bfloat16), c8_w,
                    preferred_element_type=jnp.float32)
        c = jnp.maximum(c + c8_b, 0.0)

        # --- AdaptiveAvgPool1d(1): precomputed segment-mean matrix -----------
        p = jnp.dot(pool, c.astype(jnp.bfloat16),
                    preferred_element_type=jnp.float32)           # (B, C8)

        # --- fc ----------------------------------------------------------------
        out_ref[...] = (jnp.dot(p.astype(jnp.bfloat16), fc_w,
                                preferred_element_type=jnp.float32) + fc_b)

    return kernel


# ------------------------------ wrapper --------------------------------------
def _full_spec(shape):
    # One block covering the whole array; grid is empty -> single invocation.
    return pl.BlockSpec(shape, lambda: (0,) * len(shape))


def _pack_params(params, n_samples, seq_len):
    """Fold BN scales into conv weights and pack everything into one f32 slab."""
    (dw_w, dw_s, dw_b, pw_w, pw_s, pw_b, c8_w, c8_b, fc_w, fc_b) = params
    m_rows = n_samples * seq_len
    c_max = max(C_IN, C_MID, C_CONV8, F_OUT, m_rows)
    n_rows = _r8(OFF_POOL + n_samples)

    dw_w_f = (dw_w * dw_s).astype(jnp.float32)          # (3, Cin)
    pw_w_f = (pw_w * pw_s).astype(jnp.float32)          # (Cin, Cmid)

    # Segment-mean pooling matrix as a host-side constant.
    pool_np = np.zeros((n_samples, m_rows), np.float32)
    for b in range(n_samples):
        pool_np[b, b * seq_len:(b + 1) * seq_len] = 1.0 / seq_len

    slab = jnp.zeros((n_rows, c_max), jnp.float32)
    slab = slab.at[OFF_DW:OFF_DW + 3, :C_IN].set(dw_w_f)
    slab = slab.at[OFF_PW:OFF_PW + C_IN, :C_MID].set(pw_w_f)
    slab = slab.at[OFF_C8:OFF_C8 + C_MID, :C_CONV8].set(c8_w.astype(jnp.float32))
    slab = slab.at[OFF_FC:OFF_FC + C_CONV8, :F_OUT].set(fc_w.astype(jnp.float32))
    slab = slab.at[OFF_B + 0, :C_IN].set(dw_b[0].astype(jnp.float32))
    slab = slab.at[OFF_B + 1, :C_MID].set(pw_b[0].astype(jnp.float32))
    slab = slab.at[OFF_B + 2, :C_CONV8].set(c8_b[0].astype(jnp.float32))
    slab = slab.at[OFF_B + 3, :F_OUT].set(fc_b[0].astype(jnp.float32))
    slab = slab.at[OFF_POOL:OFF_POOL + n_samples, :m_rows].set(jnp.asarray(pool_np))
    return slab


def _embed_batch(x_ncl, params):
    """x_ncl: (B, C_in, L) -> (B, F) fc output, in a single 2-input pallas_call."""
    B, C, L = x_ncl.shape
    m_rows = B * L
    slab = _pack_params(params, B, L)

    # NCL -> (B*L, C): length on sublanes, channels on lanes; whole batch as one
    # slab so each channel contraction is a single MXU matmul for the batch.
    x_flat = jnp.transpose(x_ncl.astype(jnp.float32), (0, 2, 1)).reshape(m_rows, C)

    flops = (2 * m_rows * (C * C_MID + C_MID * C_CONV8)   # 1x1 convs
             + 2 * B * m_rows * C_CONV8                   # pooling matmul
             + 2 * B * C_CONV8 * F_OUT                    # fc
             + 8 * m_rows * C)                            # depthwise + relus
    bytes_accessed = 4 * (x_flat.size + slab.size + B * F_OUT)

    kernel = _make_kernel(C, C_MID, C_CONV8, F_OUT, B, L)
    return pl.pallas_call(
        kernel,
        out_shape=jax.ShapeDtypeStruct((B, F_OUT), jnp.float32),
        in_specs=[_full_spec(x_flat.shape), _full_spec(slab.shape)],
        out_specs=_full_spec((B, F_OUT)),
        cost_estimate=pl.CostEstimate(flops=flops, transcendentals=0,
                                      bytes_accessed=bytes_accessed),
    )(x_flat, slab)


def _split_embeddings(feats):
    return [feats[:, i * NUM_EMED:(i + 1) * NUM_EMED] for i in range(N_SPK)]


@jax.jit
def _forward_train(x0, x1, params):
    n = x0.shape[0]
    # Single pallas_call over the stacked pair (one fixed-overhead dispatch).
    out = _embed_batch(jnp.concatenate([x0, x1], axis=0), params)   # (2N, F)
    return _split_embeddings(out[:n]), _split_embeddings(out[n:])


@jax.jit
def _forward_eval(x, params):
    return _split_embeddings(_embed_batch(x, params))


def forward(inputs, params, mode="train"):
    if mode == "train":
        return _forward_train(inputs[0], inputs[1], params)
    return _forward_eval(inputs, params)


# --------------------------- parameter setup ---------------------------------
def init_params(key):
    ks = jax.random.split(key, 10)
    f32 = jnp.float32
    dw_w = 0.2 * jax.random.normal(ks[0], (3, C_IN), f32)
    dw_s = 1.0 + 0.05 * jax.random.normal(ks[1], (1, C_IN), f32)   # folded BN scale
    dw_b = 0.05 * jax.random.normal(ks[2], (1, C_IN), f32)         # folded BN bias
    pw_w = 0.2 * jax.random.normal(ks[3], (C_IN, C_MID), f32)
    pw_s = 1.0 + 0.05 * jax.random.normal(ks[4], (1, C_MID), f32)
    pw_b = 0.05 * jax.random.normal(ks[5], (1, C_MID), f32)
    c8_w = 0.2 * jax.random.normal(ks[6], (C_MID, C_CONV8), f32)
    c8_b = 0.05 * jax.random.normal(ks[7], (1, C_CONV8), f32)
    fc_w = 0.2 * jax.random.normal(ks[8], (C_CONV8, F_OUT), f32)
    fc_b = 0.05 * jax.random.normal(ks[9], (1, F_OUT), f32)
    return (dw_w, dw_s, dw_b, pw_w, pw_s, pw_b, c8_w, c8_b, fc_w, fc_b)


# --------------------------- pure-JAX reference --------------------------------
def _reference(x_ncl, params):
    (dw_w, dw_s, dw_b, pw_w, pw_s, pw_b, c8_w, c8_b, fc_w, fc_b) = params
    x = jnp.transpose(x_ncl, (0, 2, 1))                  # (B, L, C)
    xp = jnp.pad(x, ((0, 0), (1, 1), (0, 0)))
    y = (xp[:, :-2, :] * dw_w[0] + xp[:, 1:-1, :] * dw_w[1] + xp[:, 2:, :] * dw_w[2])
    y = jnp.maximum(y * dw_s + dw_b, 0.0)
    z = jnp.maximum(jnp.einsum("blc,cm->blm", y, pw_w) * pw_s + pw_b, 0.0)
    c = jnp.maximum(jnp.einsum("blm,mk->blk", z, c8_w) + c8_b, 0.0)
    p = jnp.mean(c, axis=1)
    return p @ fc_w + fc_b


# --------------------------------- main ---------------------------------------
if __name__ == "__main__":
    key = jax.random.PRNGKey(0)
    k_p, k_x0, k_x1 = jax.random.split(key, 3)
    params = init_params(k_p)

    # mode='train' -> input is a pair of tensors, each (N, C_in, L) like PyTorch NCL.
    x0 = jax.random.normal(k_x0, (N_BATCH, C_IN, L_SEQ), jnp.float32)
    x1 = jax.random.normal(k_x1, (N_BATCH, C_IN, L_SEQ), jnp.float32)

    features, features_ = forward((x0, x1), params, mode="train")
    jax.block_until_ready((features, features_))

    assert len(features) == N_SPK and len(features_) == N_SPK
    assert all(f.shape == (N_BATCH, NUM_EMED) for f in list(features) + list(features_))

    # Numerical check vs. pure-JAX reference (loose tol: the kernel feeds the
    # MXU in bf16 by design).
    ref = _reference(jnp.concatenate([x0, x1], axis=0), params)
    got = jnp.concatenate(
        [jnp.concatenate(features, axis=1), jnp.concatenate(features_, axis=1)], axis=0)
    assert jnp.allclose(got, ref, rtol=2e-2, atol=2e-2), float(jnp.max(jnp.abs(got - ref)))

    # eval path (single tensor input)
    feats_eval = forward(x0, params, mode="eval")
    jax.block_until_ready(feats_eval)
    assert len(feats_eval) == N_SPK and all(f.shape == (N_BATCH, NUM_EMED) for f in feats_eval)

    print("KERNEL_OK")
</pallas_src>

<mosaic_0001>
module attributes {stable_mosaic.version = 11 : i64} {
  func.func @kernel(%arg0: memref<64x8xf32, #tpu.memory_space<vmem>>, %arg1: memref<64x64xf32, #tpu.memory_space<vmem>>, %arg2: memref<4x8xf32, #tpu.memory_space<vmem>>) attributes {dimension_semantics = [], scalar_prefetch = 0 : i64, scratch_operands = 0 : i64, tpu.core_type = #tpu.core_type<tc>} {
    %c0 = arith.constant 0 : index
    %c0_0 = arith.constant 0 : index
    %0 = vector.load %arg0[%c0, %c0_0] : memref<64x8xf32, #tpu.memory_space<vmem>>, vector<64x8xf32>
    %c0_1 = arith.constant 0 : index
    %c0_2 = arith.constant 0 : index
    %1 = vector.load %arg1[%c0_1, %c0_2] : memref<64x64xf32, #tpu.memory_space<vmem>>, vector<3x8xf32>
    %c48 = arith.constant 48 : index
    %c0_3 = arith.constant 0 : index
    %2 = vector.load %arg1[%c48, %c0_3] : memref<64x64xf32, #tpu.memory_space<vmem>>, vector<4x64xf32>
    %3 = vector.extract_strided_slice %2 {offsets = [0, 0], sizes = [1, 8], strides = [1, 1]} : vector<4x64xf32> to vector<1x8xf32>
    %4 = vector.extract_strided_slice %2 {offsets = [1, 0], sizes = [1, 16], strides = [1, 1]} : vector<4x64xf32> to vector<1x16xf32>
    %5 = vector.extract_strided_slice %2 {offsets = [2, 0], sizes = [1, 16], strides = [1, 1]} : vector<4x64xf32> to vector<1x16xf32>
    %6 = vector.extract_strided_slice %2 {offsets = [3, 0], sizes = [1, 8], strides = [1, 1]} : vector<4x64xf32> to vector<1x8xf32>
    %c8 = arith.constant 8 : index
    %c0_4 = arith.constant 0 : index
    %7 = vector.load %arg1[%c8, %c0_4] : memref<64x64xf32, #tpu.memory_space<vmem>>, vector<8x16xf32>
    %8 = arith.truncf %7 : vector<8x16xf32> to vector<8x16xbf16>
    %c16 = arith.constant 16 : index
    %c0_5 = arith.constant 0 : index
    %9 = vector.load %arg1[%c16, %c0_5] : memref<64x64xf32, #tpu.memory_space<vmem>>, vector<16x16xf32>
    %10 = arith.truncf %9 : vector<16x16xf32> to vector<16x16xbf16>
    %c32 = arith.constant 32 : index
    %c0_6 = arith.constant 0 : index
    %11 = vector.load %arg1[%c32, %c0_6] : memref<64x64xf32, #tpu.memory_space<vmem>>, vector<16x8xf32>
    %12 = arith.truncf %11 : vector<16x8xf32> to vector<16x8xbf16>
    %c56 = arith.constant 56 : index
    %c0_7 = arith.constant 0 : index
    %13 = vector.load %arg1[%c56, %c0_7] : memref<64x64xf32, #tpu.memory_space<vmem>>, vector<4x64xf32>
    %14 = arith.truncf %13 : vector<4x64xf32> to vector<4x64xbf16>
    %15 = tpu.iota {dimensions = array<i32: 0>} : vector<64x1xi32>
    %c15_i32 = arith.constant 15 : i32
    %16 = vector.broadcast %c15_i32 : i32 to vector<64x1xi32>
    %17 = arith.andi %15, %16 : vector<64x1xi32>
    %c1_i32 = arith.constant 1 : i32
    %18 = vector.broadcast %c1_i32 : i32 to vector<64x1xi32>
    %19 = arith.cmpi sge, %17, %18 : vector<64x1xi32>
    %20 = arith.extui %19 : vector<64x1xi1> to vector<64x1xi32>
    %21 = arith.sitofp %20 : vector<64x1xi32> to vector<64x1xf32>
    %c14_i32 = arith.constant 14 : i32
    %22 = vector.broadcast %c14_i32 : i32 to vector<64x1xi32>
    %23 = arith.cmpi sle, %17, %22 : vector<64x1xi32>
    %24 = arith.extui %23 : vector<64x1xi1> to vector<64x1xi32>
    %25 = arith.sitofp %24 : vector<64x1xi32> to vector<64x1xf32>
    %c1_i32_8 = arith.constant 1 : i32
    %26 = tpu.dynamic_rotate %0 by %c1_i32_8 dim 0 : vector<64x8xf32>, i32 -> vector<64x8xf32>
    %27 = vector.broadcast %21 : vector<64x1xf32> to vector<64x8xf32>
    %28 = arith.mulf %26, %27 : vector<64x8xf32>
    %c63_i32 = arith.constant 63 : i32
    %29 = tpu.dynamic_rotate %0 by %c63_i32 dim 0 : vector<64x8xf32>, i32 -> vector<64x8xf32>
    %30 = vector.broadcast %25 : vector<64x1xf32> to vector<64x8xf32>
    %31 = arith.mulf %29, %30 : vector<64x8xf32>
    %32 = vector.extract_strided_slice %1 {offsets = [0, 0], sizes = [1, 8], strides = [1, 1]} : vector<3x8xf32> to vector<1x8xf32>
    %33 = vector.broadcast %32 : vector<1x8xf32> to vector<64x8xf32>
    %34 = arith.mulf %28, %33 : vector<64x8xf32>
    %35 = vector.extract_strided_slice %1 {offsets = [1, 0], sizes = [1, 8], strides = [1, 1]} : vector<3x8xf32> to vector<1x8xf32>
    %36 = vector.broadcast %35 : vector<1x8xf32> to vector<64x8xf32>
    %37 = arith.mulf %0, %36 : vector<64x8xf32>
    %38 = arith.addf %34, %37 : vector<64x8xf32>
    %39 = vector.extract_strided_slice %1 {offsets = [2, 0], sizes = [1, 8], strides = [1, 1]} : vector<3x8xf32> to vector<1x8xf32>
    %40 = vector.broadcast %39 : vector<1x8xf32> to vector<64x8xf32>
    %41 = arith.mulf %31, %40 : vector<64x8xf32>
    %42 = arith.addf %38, %41 : vector<64x8xf32>
    %43 = vector.broadcast %3 : vector<1x8xf32> to vector<64x8xf32>
    %44 = arith.addf %42, %43 : vector<64x8xf32>
    %cst = arith.constant 0.000000e+00 : f32
    %45 = vector.broadcast %cst : f32 to vector<64x8xf32>
    %46 = arith.maximumf %44, %45 : vector<64x8xf32>
    %47 = arith.truncf %46 : vector<64x8xf32> to vector<64x8xbf16>
    %cst_9 = arith.constant dense<0.000000e+00> : vector<64x16xf32>
    %48 = tpu.matmul %47, %8, %cst_9 {dimension_numbers = #tpu.dot_dimension_numbers<[1], [0], [0], [1], [0, 0, 1, 1], [], []>} : vector<64x8xbf16>, vector<8x16xbf16>, vector<64x16xf32> -> vector<64x16xf32>
    %49 = vector.broadcast %4 : vector<1x16xf32> to vector<64x16xf32>
    %50 = arith.addf %48, %49 : vector<64x16xf32>
    %cst_10 = arith.constant 0.000000e+00 : f32
    %51 = vector.broadcast %cst_10 : f32 to vector<64x16xf32>
    %52 = arith.maximumf %50, %51 : vector<64x16xf32>
    %53 = arith.truncf %52 : vector<64x16xf32> to vector<64x16xbf16>
    %cst_11 = arith.constant dense<0.000000e+00> : vector<64x16xf32>
    %54 = tpu.matmul %53, %10, %cst_11 {dimension_numbers = #tpu.dot_dimension_numbers<[1], [0], [0], [1], [0, 0, 1, 1], [], []>} : vector<64x16xbf16>, vector<16x16xbf16>, vector<64x16xf32> -> vector<64x16xf32>
    %55 = vector.broadcast %5 : vector<1x16xf32> to vector<64x16xf32>
    %56 = arith.addf %54, %55 : vector<64x16xf32>
    %cst_12 = arith.constant 0.000000e+00 : f32
    %57 = vector.broadcast %cst_12 : f32 to vector<64x16xf32>
    %58 = arith.maximumf %56, %57 : vector<64x16xf32>
    %59 = arith.truncf %58 : vector<64x16xf32> to vector<64x16xbf16>
    %cst_13 = arith.constant dense<0.000000e+00> : vector<4x16xf32>
    %60 = tpu.matmul %14, %59, %cst_13 {dimension_numbers = #tpu.dot_dimension_numbers<[1], [0], [0], [1], [0, 0, 1, 1], [], []>} : vector<4x64xbf16>, vector<64x16xbf16>, vector<4x16xf32> -> vector<4x16xf32>
    %61 = arith.truncf %60 : vector<4x16xf32> to vector<4x16xbf16>
    %cst_14 = arith.constant dense<0.000000e+00> : vector<4x8xf32>
    %62 = tpu.matmul %61, %12, %cst_14 {dimension_numbers = #tpu.dot_dimension_numbers<[1], [0], [0], [1], [0, 0, 1, 1], [], []>} : vector<4x16xbf16>, vector<16x8xbf16>, vector<4x8xf32> -> vector<4x8xf32>
    %63 = vector.broadcast %6 : vector<1x8xf32> to vector<4x8xf32>
    %64 = arith.addf %62, %63 : vector<4x8xf32>
    %c0_15 = arith.constant 0 : index
    %c0_16 = arith.constant 0 : index
    %65 = vector.load %arg2[%c0_15, %c0_16] : memref<4x8xf32, #tpu.memory_space<vmem>>, vector<4x8xf32>
    tpu.vector_store %arg2[%c0_15, %c0_16], %64 {strides = array<i32>} : memref<4x8xf32, #tpu.memory_space<vmem>>, vector<4x8xf32>,
    return
  }
}

</mosaic_0001>

<llo_original>
// kernel: _forward_train.1
$region0: #{_forward_train.1}
  #allocation0 [shape = 'u32[]', space=smem, size = 0x4, offset = 0x4, fixed_abs, tag = 'smem constant byte address 0x4 - core index']
  #allocation1 [shape = 'u32[72,128]{1,0:T(1,128)}', space=vmem, size = 0x9000, scoped, tag = 'internal scratch']
  %s0 = inlined_call_operand.vmem [shape: f32[64,8], index: 0, kind: input, shape index: {}]
  %s1 = inlined_call_operand.vmem [shape: f32[64,64], index: 1, kind: input, shape index: {}]
  %s2 = inlined_call_operand.vmem [shape: f32[4,8], index: 2, kind: output, shape index: {}]
  %s3 = sld [smem:[#allocation0]]
  $region18: #{_forward_train.1} parent=0
    _
  %s5 = ssub.s32 1, %s3
  %s6 = scalar_select 0, %s5, %s3
  // Predicated region
  $region2: #{_forward_train.1} parent=0 // pred_check
    _
  $region3: #{_forward_train.1} parent=0 // pred_check_branch
    %8 = sbr.rel (0) target = $region5
  $region4: #{_forward_train.1} parent=0 // pred_region
    _
  $region5: #{_forward_train.1} parent=0 // pred_fallthru
    _
  // Predicated region
  $region6: #{_forward_train.1} parent=0 // pred_check
    _
  $region7: #{_forward_train.1} parent=0 // pred_check_branch
    %10 = sbr.rel (0) target = $region9
  $region8: #{_forward_train.1} parent=0 // pred_region
    _
  $region9: #{_forward_train.1} parent=0 // pred_fallthru
    _
  %v12 = vld [vmem:[%s0] sm:$0xff]
  %v13 = vld [vmem:[%s0 + $0x8] sm:$0xff]
  %v14 = vld [vmem:[%s0 + $0x10] sm:$0xff]
  %v15 = vld [vmem:[%s0 + $0x18] sm:$0xff]
  %v16 = vld [vmem:[%s0 + $0x20] sm:$0xff]
  %v17 = vld [vmem:[%s0 + $0x28] sm:$0xff]
  %v18 = vld [vmem:[%s0 + $0x30] sm:$0xff]
  %v19 = vld [vmem:[%s0 + $0x38] sm:$0xff]
  %v20 = vld [vmem:[%s1] sm:$0x7]
  %v21 = vld [vmem:[%s1 + $0x30] sm:$0xf]
  %v22 = vld [vmem:[%s1 + $0x8] sm:$0xff]
  %v23 = vpack.c.bf16 %v22, %v22
  %v24 = vld [vmem:[%s1 + $0x10] sm:$0xff]
  %v25 = vld [vmem:[%s1 + $0x18] sm:$0xff]
  %v26 = vpack.c.bf16 %v25, %v24
  %v27 = vld [vmem:[%s1 + $0x20] sm:$0xff]
  %v28 = vld [vmem:[%s1 + $0x28] sm:$0xff]
  %v29 = vpack.c.bf16 %v28, %v27
  %v30 = vld [vmem:[%s1 + $0x38] sm:$0xf]
  %v31 = vpack.c.bf16 %v30, %v30
  %v32 = vlaneseq
  %v33 = vshrl.u32 %v32, 7
  %v34 = vadd.s32 %v33, 8
  %v35 = vadd.s32 %v33, 16
  %v36 = vadd.s32 %v33, 24
  %v37 = vadd.s32 %v33, 32
  %v38 = vadd.s32 %v33, 40
  %v39 = vadd.s32 %v33, 48
  %v40 = vadd.s32 %v33, 56
  %v41 = vand.u32 %v33, 15
  %v42 = vand.u32 %v34, 15
  %v43 = vand.u32 %v35, 15
  %v44 = vand.u32 %v36, 15
  %v45 = vand.u32 %v37, 15
  %v46 = vand.u32 %v38, 15
  %v47 = vand.u32 %v39, 15
  %v48 = vand.u32 %v40, 15
  %vm49 = vcmp.ge.s32.totalorder %v41, 1
  %vm50 = vcmp.ge.s32.totalorder %v42, 1
  %vm51 = vcmp.ge.s32.totalorder %v43, 1
  %vm52 = vcmp.ge.s32.totalorder %v44, 1
  %vm53 = vcmp.ge.s32.totalorder %v45, 1
  %vm54 = vcmp.ge.s32.totalorder %v46, 1
  %vm55 = vcmp.ge.s32.totalorder %v47, 1
  %vm56 = vcmp.ge.s32.totalorder %v48, 1
  %v57 = vsel %vm49, 1, 0
  %v58 = vsel %vm50, 1, 0
  %v59 = vsel %vm51, 1, 0
  %v60 = vsel %vm52, 1, 0
  %v61 = vsel %vm53, 1, 0
  %v62 = vsel %vm54, 1, 0
  %v63 = vsel %vm55, 1, 0
  %v64 = vsel %vm56, 1, 0
  %v65 = vcvt.s32.f32 %v57
  %v66 = vcvt.s32.f32 %v58
  %v67 = vcvt.s32.f32 %v59
  %v68 = vcvt.s32.f32 %v60
  %v69 = vcvt.s32.f32 %v61
  %v70 = vcvt.s32.f32 %v62
  %v71 = vcvt.s32.f32 %v63
  %v72 = vcvt.s32.f32 %v64
  %vm73 = vcmp.le.s32.totalorder %v41, 14
  %vm74 = vcmp.le.s32.totalorder %v42, 14
  %vm75 = vcmp.le.s32.totalorder %v43, 14
  %vm76 = vcmp.le.s32.totalorder %v44, 14
  %vm77 = vcmp.le.s32.totalorder %v45, 14
  %vm78 = vcmp.le.s32.totalorder %v46, 14
  %vm79 = vcmp.le.s32.totalorder %v47, 14
  %vm80 = vcmp.le.s32.totalorder %v48, 14
  %v81 = vsel %vm73, 1, 0
  %v82 = vsel %vm74, 1, 0
  %v83 = vsel %vm75, 1, 0
  %v84 = vsel %vm76, 1, 0
  %v85 = vsel %vm77, 1, 0
  %v86 = vsel %vm78, 1, 0
  %v87 = vsel %vm79, 1, 0
  %v88 = vsel %vm80, 1, 0
  %v89 = vcvt.s32.f32 %v81
  %v90 = vcvt.s32.f32 %v82
  %v91 = vcvt.s32.f32 %v83
  %v92 = vcvt.s32.f32 %v84
  %v93 = vcvt.s32.f32 %v85
  %v94 = vcvt.s32.f32 %v86
  %v95 = vcvt.s32.f32 %v87
  %v96 = vcvt.s32.f32 %v88
  %v97 = vrot.slane %v12, 7
  %v98 = vrot.slane %v13, 7
  %v99 = vrot.slane %v14, 7
  %v100 = vrot.slane %v15, 7
  %v101 = vrot.slane %v16, 7
  %v102 = vrot.slane %v17, 7
  %v103 = vrot.slane %v18, 7
  %v104 = vrot.slane %v19, 7
  %vm105 = vcmp.lt.s32.totalorder %v33, 1
  %v106 = vsel %vm105, %v103, %v104
  %v107 = vsel %vm105, %v102, %v103
  %v108 = vsel %vm105, %v101, %v102
  %v109 = vsel %vm105, %v100, %v101
  %v110 = vsel %vm105, %v99, %v100
  %v111 = vsel %vm105, %v98, %v99
  %v112 = vsel %vm105, %v97, %v98
  %v113 = vsel %vm105, %v104, %v97
  %v114 = vmul.f32 %v113, %v65
  %v115 = vmul.f32 %v112, %v66
  %v116 = vmul.f32 %v111, %v67
  %v117 = vmul.f32 %v110, %v68
  %v118 = vmul.f32 %v109, %v69
  %v119 = vmul.f32 %v108, %v70
  %v120 = vmul.f32 %v107, %v71
  %v121 = vmul.f32 %v106, %v72
  %v122 = vrot.slane %v12, 1
  %v123 = vrot.slane %v13, 1
  %v124 = vrot.slane %v14, 1
  %v125 = vrot.slane %v15, 1
  %v126 = vrot.slane %v16, 1
  %v127 = vrot.slane %v17, 1
  %v128 = vrot.slane %v18, 1
  %v129 = vrot.slane %v19, 1
  %vm130 = vcmp.lt.s32.totalorder %v33, 7
  %v131 = vsel %vm130, %v128, %v129
  %v132 = vsel %vm130, %v127, %v128
  %v133 = vsel %vm130, %v126, %v127
  %v134 = vsel %vm130, %v125, %v126
  %v135 = vsel %vm130, %v124, %v125
  %v136 = vsel %vm130, %v123, %v124
  %v137 = vsel %vm130, %v122, %v123
  %v138 = vsel %vm130, %v129, %v122
  %v139 = vmul.f32 %v137, %v89
  %v140 = vmul.f32 %v136, %v90
  %v141 = vmul.f32 %v135, %v91
  %v142 = vmul.f32 %v134, %v92
  %v143 = vmul.f32 %v133, %v93
  %v144 = vmul.f32 %v132, %v94
  %v145 = vmul.f32 %v131, %v95
  %v146 = vmul.f32 %v138, %v96
  %v147 = vperm.slane %v20, 0
  %v148 = vmul.f32 %v114, %v147
  %v149 = vmul.f32 %v115, %v147
  %v150 = vmul.f32 %v116, %v147
  %v151 = vmul.f32 %v117, %v147
  %v152 = vmul.f32 %v118, %v147
  %v153 = vmul.f32 %v119, %v147
  %v154 = vmul.f32 %v120, %v147
  %v155 = vmul.f32 %v121, %v147
  %v156 = vperm.slane %v20, 1
  %v157 = vmul.f32 %v12, %v156
  %v158 = vmul.f32 %v13, %v156
  %v159 = vmul.f32 %v14, %v156
  %v160 = vmul.f32 %v15, %v156
  %v161 = vmul.f32 %v16, %v156
  %v162 = vmul.f32 %v17, %v156
  %v163 = vmul.f32 %v18, %v156
  %v164 = vmul.f32 %v19, %v156
  %v165 = vadd.f32 %v148, %v157
  %v166 = vadd.f32 %v149, %v158
  %v167 = vadd.f32 %v150, %v159
  %v168 = vadd.f32 %v151, %v160
  %v169 = vadd.f32 %v152, %v161
  %v170 = vadd.f32 %v153, %v162
  %v171 = vadd.f32 %v154, %v163
  %v172 = vadd.f32 %v155, %v164
  %v173 = vperm.slane %v20, 2
  %v174 = vmul.f32 %v139, %v173
  %v175 = vmul.f32 %v140, %v173
  %v176 = vmul.f32 %v141, %v173
  %v177 = vmul.f32 %v142, %v173
  %v178 = vmul.f32 %v143, %v173
  %v179 = vmul.f32 %v144, %v173
  %v180 = vmul.f32 %v145, %v173
  %v181 = vmul.f32 %v146, %v173
  %v182 = vadd.f32 %v165, %v174
  %v183 = vadd.f32 %v166, %v175
  %v184 = vadd.f32 %v167, %v176
  %v185 = vadd.f32 %v168, %v177
  %v186 = vadd.f32 %v169, %v178
  %v187 = vadd.f32 %v170, %v179
  %v188 = vadd.f32 %v171, %v180
  %v189 = vadd.f32 %v172, %v181
  %v190 = vperm.slane %v21, 0
  %v191 = vadd.f32 %v182, %v190
  %v192 = vadd.f32 %v183, %v190
  %v193 = vadd.f32 %v184, %v190
  %v194 = vadd.f32 %v185, %v190
  %v195 = vadd.f32 %v186, %v190
  %v196 = vadd.f32 %v187, %v190
  %v197 = vadd.f32 %v188, %v190
  %v198 = vadd.f32 %v189, %v190
  %v199 = vmax.f32 %v191, 0.0
  %v200 = vmax.f32 %v192, 0.0
  %v201 = vmax.f32 %v193, 0.0
  %v202 = vmax.f32 %v194, 0.0
  %v203 = vmax.f32 %v195, 0.0
  %v204 = vmax.f32 %v196, 0.0
  %v205 = vmax.f32 %v197, 0.0
  %v206 = vmax.f32 %v198, 0.0
  %v207 = vpack.c.bf16 %v200, %v199
  %v208 = vpack.c.bf16 %v202, %v201
  %v209 = vpack.c.bf16 %v204, %v203
  %v210 = vpack.c.bf16 %v206, %v205
  %v211 = vperm.slane %v21, 1
  %vm212 = vcmask 64512
  %v214 = vsel %vm212, %v207, 0
  %v217 = vsel %vm212, %v208, 0
  %v220 = vsel %vm212, %v209, 0
  %v223 = vsel %vm212, %v210, 0
  %vm225 = vcmask 1043456
  %v227 = vsel %vm225, %v23, 0
  %229 = vmatpush.bf16.msra.mxu0 0
  %230 = vmatpush.bf16.msra.mxu0 0
  %231 = vmatpush.bf16.msra.mxu0 0
  %232 = vmatpush.bf16.msra.mxu0 0
  %233 = vmatpush.bf16.msra.mxu0 0
  %234 = vmatpush.bf16.msra.mxu0 0
  %235 = vmatpush.bf16.msra.mxu0 0
  %236 = vmatpush.bf16.msra.mxu0 %v227
  %237 = vmatmul.bf16.gmra.mxu0 %v214
  %v238 = vpop.f32.mrf.mxu0
  %v239 = vadd.f32 %v211, %v238
  %v240 = vpop.f32.mrf.mxu0
  %v241 = vadd.f32 %v211, %v240
  %242 = vmatmul.bf16.gmra.mxu0 %v217
  %v243 = vpop.f32.mrf.mxu0
  %v244 = vadd.f32 %v211, %v243
  %v245 = vpop.f32.mrf.mxu0
  %v246 = vadd.f32 %v211, %v245
  %247 = vmatmul.bf16.gmra.mxu0 %v220
  %v248 = vpop.f32.mrf.mxu0
  %v249 = vadd.f32 %v211, %v248
  %v250 = vpop.f32.mrf.mxu0
  %v251 = vadd.f32 %v211, %v250
  %252 = vmatmul.bf16.gmra.mxu0 %v223
  %v253 = vpop.f32.mrf.mxu0
  %v254 = vadd.f32 %v211, %v253
  %v255 = vpop.f32.mrf.mxu0
  %v256 = vadd.f32 %v211, %v255
  %257 = vdwg.mxu0
  %v258 = vmax.f32 %v239, 0.0
  %v259 = vmax.f32 %v241, 0.0
  %v260 = vmax.f32 %v244, 0.0
  %v261 = vmax.f32 %v246, 0.0
  %v262 = vmax.f32 %v249, 0.0
  %v263 = vmax.f32 %v251, 0.0
  %v264 = vmax.f32 %v254, 0.0
  %v265 = vmax.f32 %v256, 0.0
  %v266 = vpack.c.bf16 %v259, %v258
  %v267 = vpack.c.bf16 %v261, %v260
  %v268 = vpack.c.bf16 %v263, %v262
  %v269 = vpack.c.bf16 %v265, %v264
  %v270 = vperm.slane %v21, 2
  %vm271 = vcmask 130048
  %v273 = vsel %vm271, %v266, 0
  %v276 = vsel %vm271, %v267, 0
  %v279 = vsel %vm271, %v268, 0
  %v282 = vsel %vm271, %v269, 0
  %284 = vmatpush.bf16.msra.mxu0 0
  %285 = vmatpush.bf16.msra.mxu0 0
  %286 = vmatpush.bf16.msra.mxu0 0
  %287 = vmatpush.bf16.msra.mxu0 0
  %288 = vmatpush.bf16.msra.mxu0 0
  %289 = vmatpush.bf16.msra.mxu0 0
  %290 = vmatpush.bf16.msra.mxu0 0
  %291 = vmatpush.bf16.msra.mxu0 %v26
  %292 = vmatmul.bf16.gmra.mxu0 %v273
  %v293 = vpop.f32.mrf.mxu0
  %v294 = vadd.f32 %v270, %v293
  %v295 = vpop.f32.mrf.mxu0
  %v296 = vadd.f32 %v270, %v295
  %297 = vmatmul.bf16.gmra.mxu0 %v276
  %v298 = vpop.f32.mrf.mxu0
  %v299 = vadd.f32 %v270, %v298
  %v300 = vpop.f32.mrf.mxu0
  %v301 = vadd.f32 %v270, %v300
  %302 = vmatmul.bf16.gmra.mxu0 %v279
  %v303 = vpop.f32.mrf.mxu0
  %v304 = vadd.f32 %v270, %v303
  %v305 = vpop.f32.mrf.mxu0
  %v306 = vadd.f32 %v270, %v305
  %307 = vmatmul.bf16.gmra.mxu0 %v282
  %v308 = vpop.f32.mrf.mxu0
  %v309 = vadd.f32 %v270, %v308
  %v310 = vpop.f32.mrf.mxu0
  %v311 = vadd.f32 %v270, %v310
  %312 = vdwg.mxu0
  %v313 = vmax.f32 %v294, 0.0
  %v314 = vmax.f32 %v296, 0.0
  %v315 = vmax.f32 %v299, 0.0
  %v316 = vmax.f32 %v301, 0.0
  %v317 = vmax.f32 %v304, 0.0
  %v318 = vmax.f32 %v306, 0.0
  %v319 = vmax.f32 %v309, 0.0
  %v320 = vmax.f32 %v311, 0.0
  %v321 = vpack.c.bf16 %v314, %v313
  %v322 = vpack.c.bf16 %v316, %v315
  %v323 = vpack.c.bf16 %v318, %v317
  %v324 = vpack.c.bf16 %v320, %v319
  %vm325 = vcmask 523264
  %v327 = vsel %vm325, %v31, 0
  %329 = vmatpush.bf16.msra.mxu0 0
  %330 = vmatpush.bf16.msra.mxu0 0
  %331 = vmatpush.bf16.msra.mxu0 0
  %332 = vmatpush.bf16.msra.mxu0 0
  %333 = vmatpush.bf16.msra.mxu0 %v324
  %334 = vmatpush.bf16.msra.mxu0 %v323
  %335 = vmatpush.bf16.msra.mxu0 %v322
  %336 = vmatpush.bf16.msra.mxu0 %v321
  %337 = vmatmul.bf16.gmra.mxu0 %v327
  %v338 = vpop.f32.mrf.mxu0
  %v339 = vadd.f32 0.0, %v338
  %v340 = vpop.f32.mrf.mxu0
  %341 = vdwg.mxu0
  %v342 = vpack.c.bf16 %v339, %v339
  %v343 = vperm.slane %v21, 3
  %v345 = vsel %vm271, %v342, 0
  %347 = vmatpush.bf16.msra.mxu0 0
  %348 = vmatpush.bf16.msra.mxu0 0
  %349 = vmatpush.bf16.msra.mxu0 0
  %350 = vmatpush.bf16.msra.mxu0 0
  %351 = vmatpush.bf16.msra.mxu0 0
  %352 = vmatpush.bf16.msra.mxu0 0
  %353 = vmatpush.bf16.msra.mxu0 0
  %354 = vmatpush.bf16.msra.mxu0 %v29
  %355 = vmatmul.bf16.gmra.mxu0 %v345
  %v356 = vpop.f32.mrf.mxu0
  %v357 = vadd.f32 %v343, %v356
  %v358 = vpop.f32.mrf.mxu0
  %359 = vdwg.mxu0
  %vm360 = vcmask 60416
  %361 = vst.msk [vmem:[%s2] sm:$0xf] %vm360, %v357
  // Predicated region
  $region10: #{_forward_train.1} parent=0 // pred_check
    _
  $region11: #{_forward_train.1} parent=0 // pred_check_branch
    %363 = sbr.rel (0) target = $region13
  $region12: #{_forward_train.1} parent=0 // pred_region
    _
  $region13: #{_forward_train.1} parent=0 // pred_fallthru
    _
  // Predicated region
  $region14: #{_forward_train.1} parent=0 // pred_check
    _
  $region15: #{_forward_train.1} parent=0 // pred_check_branch
    %365 = sbr.rel (0) target = $region17
  $region16: #{_forward_train.1} parent=0 // pred_region
    _
  $region17: #{_forward_train.1} parent=0 // pred_fallthru
    _

</llo_original>
